<compile_context>
chip_gen: v6e
topology: v6e:2x2x1
jax: 0.10.0
libtpu: 0.0.40
codegen_flags: <defaults>
</compile_context>

<pallas_src>
from functools import partial

import numpy as np
import jax
import jax.numpy as jnp
from jax import lax
from jax.experimental import pallas as pl
from jax.experimental.pallas import tpu as pltpu


# ----------------------------------------------------------------------------
# Fused kernel: im2col conv + bias + ReLU + global avg pool + 2-layer MLP.
#   mask_ref : (9, bb*H*W)        per-tap validity mask (implicit zero pad)
#   x_ref    : (C_in, bb*H*W)     lane-dense activations for this batch block
#   wcol_ref : (C_out, 9*C_in)    im2col conv weight
#   bconv_ref: (C_out, 1)         conv bias
#   w1/b1    : (C_out, hidden), (1, hidden)
#   w2/b2    : (hidden, act_pad), (1, act_pad)   (lane-padded to 128)
#   out_ref  : (bb, act_pad)      (leading grid dim squeezed away)
# ----------------------------------------------------------------------------
def fused_idm_kernel(mask_ref, x_ref, wcol_ref, bconv_ref, w1_ref, b1_ref,
                     w2_ref, b2_ref, out_ref, *, H, W):
    HW = H * W
    _, cols = x_ref.shape
    bb = cols // HW

    x = x_ref[...]                      # (C_in, bb*HW)
    mask = mask_ref[...]                # (9, bb*HW) of {0., 1.}

    # --- im2col: 9 shifted + masked copies stacked along K (sublane axis) ---
    taps = []
    t = 0
    for dy in (-1, 0, 1):
        for dx in (-1, 0, 1):
            d = dy * W + dx
            if d == 0:
                taps.append(x)          # center tap: mask is all-ones
            else:
                # shifted[n] = x[n + d] (wrapped entries are masked to 0)
                shifted = jnp.concatenate([x[:, d:], x[:, :d]], axis=-1)
                taps.append(shifted * mask[t:t + 1, :])
            t += 1
    patches = jnp.concatenate(taps, axis=0)          # (9*C_in, bb*HW)

    # --- single lane-dense conv matmul on the MXU ---
    conv = jnp.dot(wcol_ref[...], patches,
                   preferred_element_type=jnp.float32)   # (C_out, bb*HW)
    conv = jnp.maximum(conv + bconv_ref[...], 0.0)       # bias + ReLU

    # --- global average pool: lane-reduce each HW-wide image segment ---
    segs = [jnp.sum(conv[:, b * HW:(b + 1) * HW], axis=-1, keepdims=True)
            for b in range(bb)]
    pooled_ob = jnp.concatenate(segs, axis=-1) if bb > 1 else segs[0]  # (C_out, bb)
    pooled = pooled_ob.T * (1.0 / HW)                                  # (bb, C_out)

    # --- fused MLP head ---
    h = jnp.maximum(jnp.dot(pooled, w1_ref[...],
                            preferred_element_type=jnp.float32) + b1_ref[...], 0.0)
    pred = jnp.dot(h, w2_ref[...],
                   preferred_element_type=jnp.float32) + b2_ref[...]   # (bb, act_pad)
    out_ref[...] = pred


# ----------------------------------------------------------------------------
# Wrapper: layout plumbing + single pallas_call.
# ----------------------------------------------------------------------------
def idm_forward(obs_nchw, params):
    w_conv, b_conv, w1, b1, w2, b2 = params
    B, C_in, H, W = obs_nchw.shape
    HW = H * W
    C_out = w_conv.shape[-1]
    hidden = w1.shape[-1]
    act_dim = w2.shape[-1]
    act_pad = ((act_dim + 127) // 128) * 128          # lane-dense output slab

    # Batch blocking: prefer >=2 grid blocks (v7x megacore), <=64 images/block.
    bb = min(64, max(1, B // 2)) if B > 1 else 1
    while B % bb:
        bb -= 1
    nb = B // bb

    # NCHW kept; channels on sublanes, (batch*spatial) on lanes.
    x2d = jnp.transpose(obs_nchw, (1, 0, 2, 3)).reshape(C_in, B * HW)

    # im2col weight: (C_out, 9*C_in), tap-major (ky outer, kx inner), channel minor.
    w_col = jnp.transpose(w_conv, (3, 0, 1, 2)).reshape(C_out, 9 * C_in)
    b_col = b_conv.reshape(C_out, 1)

    # Pad fc2 to a 128-wide lane-dense output; slice back outside the kernel.
    w2p = jnp.pad(w2, ((0, 0), (0, act_pad - act_dim)))
    b2p = jnp.pad(b2, ((0, 0), (0, act_pad - act_dim)))

    # Per-tap validity masks (implicit zero padding), built host-side once.
    ys, xs = np.divmod(np.arange(HW), W)
    mask_rows = []
    for dy in (-1, 0, 1):
        for dx in (-1, 0, 1):
            valid = ((ys + dy >= 0) & (ys + dy < H) &
                     (xs + dx >= 0) & (xs + dx < W))
            mask_rows.append(np.tile(valid.astype(np.float32), bb))
    tap_mask = jnp.asarray(np.stack(mask_rows, axis=0))        # (9, bb*HW)

    out = pl.pallas_call(
        partial(fused_idm_kernel, H=H, W=W),
        out_shape=jax.ShapeDtypeStruct((nb, bb, act_pad), jnp.float32),
        grid=(nb,),
        in_specs=[
            pl.BlockSpec((9, bb * HW), lambda i: (0, 0)),        # tap masks
            pl.BlockSpec((C_in, bb * HW), lambda i: (0, i)),     # obs block
            pl.BlockSpec((C_out, 9 * C_in), lambda i: (0, 0)),   # conv weight
            pl.BlockSpec((C_out, 1), lambda i: (0, 0)),          # conv bias
            pl.BlockSpec((C_out, hidden), lambda i: (0, 0)),     # fc1 weight
            pl.BlockSpec((1, hidden), lambda i: (0, 0)),         # fc1 bias
            pl.BlockSpec((hidden, act_pad), lambda i: (0, 0)),   # fc2 weight (padded)
            pl.BlockSpec((1, act_pad), lambda i: (0, 0)),        # fc2 bias (padded)
        ],
        out_specs=pl.BlockSpec((pl.Squeezed(), bb, act_pad), lambda i: (i, 0, 0)),
        compiler_params=pltpu.CompilerParams(
            dimension_semantics=("parallel",),
            vmem_limit_bytes=32 * 1024 * 1024),
    )(tap_mask, x2d, w_col, b_col, w1, b1, w2p, b2p)

    return out.reshape(B, act_pad)[:, :act_dim]


# ----------------------------------------------------------------------------
# Pure-JAX reference for correctness checking.
# ----------------------------------------------------------------------------
def ref_forward(obs_nchw, params):
    w_conv, b_conv, w1, b1, w2, b2 = params
    C_out = w_conv.shape[-1]
    y = lax.conv_general_dilated(
        obs_nchw, w_conv, window_strides=(1, 1), padding=((1, 1), (1, 1)),
        dimension_numbers=('NCHW', 'HWIO', 'NCHW'))
    y = jnp.maximum(y + b_conv.reshape(1, C_out, 1, 1), 0.0)
    pooled = jnp.mean(y, axis=(2, 3))
    h = jnp.maximum(pooled @ w1 + b1, 0.0)
    return h @ w2 + b2


if __name__ == "__main__":
    # Small shapes consistent with an image-observation IDM baseline.
    B, C_in, H, W = 2, 4, 16, 16
    C_out, hidden, act_dim = 8, 32, 4

    key = jax.random.PRNGKey(0)
    k_obs, k_wc, k_bc, k_w1, k_b1, k_w2, k_b2 = jax.random.split(key, 7)

    obs = jax.random.normal(k_obs, (B, C_in, H, W), jnp.float32)   # NCHW like PyTorch

    params = (
        jax.random.normal(k_wc, (3, 3, C_in, C_out), jnp.float32) * 0.1,  # conv weight (HWIO)
        jax.random.normal(k_bc, (1, C_out), jnp.float32) * 0.1,           # conv bias
        jax.random.normal(k_w1, (C_out, hidden), jnp.float32) * 0.1,      # fc1 weight
        jax.random.normal(k_b1, (1, hidden), jnp.float32) * 0.1,          # fc1 bias
        jax.random.normal(k_w2, (hidden, act_dim), jnp.float32) * 0.1,    # fc2 weight
        jax.random.normal(k_b2, (1, act_dim), jnp.float32) * 0.1,         # fc2 bias
    )

    # TODO(synk): the hydra-instantiated `model` is a runtime-config black box;
    # a representative conv->pool->MLP IDM head is implemented here.
    pred = jax.block_until_ready(jax.jit(idm_forward)(obs, params))
    ref = jax.block_until_ready(ref_forward(obs, params))
    np.testing.assert_allclose(np.asarray(pred), np.asarray(ref),
                               rtol=1e-4, atol=1e-5)

    print("KERNEL_OK")
</pallas_src>

<mosaic_0001>
module attributes {stable_mosaic.version = 11 : i64} {
  func.func @fused_idm_kernel(%arg0: i32, %arg1: memref<9x256xf32, #tpu.memory_space<vmem>>, %arg2: memref<4x256xf32, #tpu.memory_space<vmem>>, %arg3: memref<8x36xf32, #tpu.memory_space<vmem>>, %arg4: memref<8x1xf32, #tpu.memory_space<vmem>>, %arg5: memref<8x32xf32, #tpu.memory_space<vmem>>, %arg6: memref<1x32xf32, #tpu.memory_space<vmem>>, %arg7: memref<32x128xf32, #tpu.memory_space<vmem>>, %arg8: memref<1x128xf32, #tpu.memory_space<vmem>>, %arg9: memref<1x1x128xf32, #tpu.memory_space<vmem>>) attributes {dimension_semantics = [#tpu.dimension_semantics<parallel>], iteration_bounds = array<i64: 2>, scalar_prefetch = 0 : i64, scratch_operands = 0 : i64, tpu.core_type = #tpu.core_type<tc>, window_params = [{pipeline_mode = #tpu.pipeline_mode<synchronous>, transform_indices = @transform_0, window_bounds = array<i64: 9, 256>}, {transform_indices = @transform_1, window_bounds = array<i64: 4, 256>}, {pipeline_mode = #tpu.pipeline_mode<synchronous>, transform_indices = @transform_2, window_bounds = array<i64: 8, 36>}, {pipeline_mode = #tpu.pipeline_mode<synchronous>, transform_indices = @transform_3, window_bounds = array<i64: 8, 1>}, {pipeline_mode = #tpu.pipeline_mode<synchronous>, transform_indices = @transform_4, window_bounds = array<i64: 8, 32>}, {pipeline_mode = #tpu.pipeline_mode<synchronous>, transform_indices = @transform_5, window_bounds = array<i64: 1, 32>}, {pipeline_mode = #tpu.pipeline_mode<synchronous>, transform_indices = @transform_6, window_bounds = array<i64: 32, 128>}, {pipeline_mode = #tpu.pipeline_mode<synchronous>, transform_indices = @transform_7, window_bounds = array<i64: 1, 128>}, {transform_indices = @transform_8, window_bounds = array<i64: 1, 1, 128>}]} {
    %c0 = arith.constant 0 : index
    %c0_0 = arith.constant 0 : index
    %0 = vector.load %arg2[%c0, %c0_0] : memref<4x256xf32, #tpu.memory_space<vmem>>, vector<4x256xf32>
    %c0_1 = arith.constant 0 : index
    %c0_2 = arith.constant 0 : index
    %1 = vector.load %arg1[%c0_1, %c0_2] : memref<9x256xf32, #tpu.memory_space<vmem>>, vector<9x256xf32>
    %2 = vector.extract_strided_slice %0 {offsets = [0, 239], sizes = [4, 17], strides = [1, 1]} : vector<4x256xf32> to vector<4x17xf32>
    %3 = vector.extract_strided_slice %0 {offsets = [0, 0], sizes = [4, 239], strides = [1, 1]} : vector<4x256xf32> to vector<4x239xf32>
    %4 = tpu.concatenate %2, %3 in 1 : vector<4x17xf32>, vector<4x239xf32> -> vector<4x256xf32>
    %5 = vector.extract_strided_slice %1 {offsets = [0, 0], sizes = [1, 256], strides = [1, 1]} : vector<9x256xf32> to vector<1x256xf32>
    %6 = vector.broadcast %5 : vector<1x256xf32> to vector<4x256xf32>
    %7 = arith.mulf %4, %6 : vector<4x256xf32>
    %8 = vector.extract_strided_slice %0 {offsets = [0, 240], sizes = [4, 16], strides = [1, 1]} : vector<4x256xf32> to vector<4x16xf32>
    %9 = vector.extract_strided_slice %0 {offsets = [0, 0], sizes = [4, 240], strides = [1, 1]} : vector<4x256xf32> to vector<4x240xf32>
    %10 = tpu.concatenate %8, %9 in 1 : vector<4x16xf32>, vector<4x240xf32> -> vector<4x256xf32>
    %11 = vector.extract_strided_slice %1 {offsets = [1, 0], sizes = [1, 256], strides = [1, 1]} : vector<9x256xf32> to vector<1x256xf32>
    %12 = vector.broadcast %11 : vector<1x256xf32> to vector<4x256xf32>
    %13 = arith.mulf %10, %12 : vector<4x256xf32>
    %14 = vector.extract_strided_slice %0 {offsets = [0, 241], sizes = [4, 15], strides = [1, 1]} : vector<4x256xf32> to vector<4x15xf32>
    %15 = vector.extract_strided_slice %0 {offsets = [0, 0], sizes = [4, 241], strides = [1, 1]} : vector<4x256xf32> to vector<4x241xf32>
    %16 = tpu.concatenate %14, %15 in 1 : vector<4x15xf32>, vector<4x241xf32> -> vector<4x256xf32>
    %17 = vector.extract_strided_slice %1 {offsets = [2, 0], sizes = [1, 256], strides = [1, 1]} : vector<9x256xf32> to vector<1x256xf32>
    %18 = vector.broadcast %17 : vector<1x256xf32> to vector<4x256xf32>
    %19 = arith.mulf %16, %18 : vector<4x256xf32>
    %20 = vector.extract_strided_slice %0 {offsets = [0, 255], sizes = [4, 1], strides = [1, 1]} : vector<4x256xf32> to vector<4x1xf32>
    %21 = vector.extract_strided_slice %0 {offsets = [0, 0], sizes = [4, 255], strides = [1, 1]} : vector<4x256xf32> to vector<4x255xf32>
    %22 = tpu.concatenate %20, %21 in 1 : vector<4x1xf32>, vector<4x255xf32> -> vector<4x256xf32>
    %23 = vector.extract_strided_slice %1 {offsets = [3, 0], sizes = [1, 256], strides = [1, 1]} : vector<9x256xf32> to vector<1x256xf32>
    %24 = vector.broadcast %23 : vector<1x256xf32> to vector<4x256xf32>
    %25 = arith.mulf %22, %24 : vector<4x256xf32>
    %26 = vector.extract_strided_slice %0 {offsets = [0, 1], sizes = [4, 255], strides = [1, 1]} : vector<4x256xf32> to vector<4x255xf32>
    %27 = vector.extract_strided_slice %0 {offsets = [0, 0], sizes = [4, 1], strides = [1, 1]} : vector<4x256xf32> to vector<4x1xf32>
    %28 = tpu.concatenate %26, %27 in 1 : vector<4x255xf32>, vector<4x1xf32> -> vector<4x256xf32>
    %29 = vector.extract_strided_slice %1 {offsets = [5, 0], sizes = [1, 256], strides = [1, 1]} : vector<9x256xf32> to vector<1x256xf32>
    %30 = vector.broadcast %29 : vector<1x256xf32> to vector<4x256xf32>
    %31 = arith.mulf %28, %30 : vector<4x256xf32>
    %32 = vector.extract_strided_slice %0 {offsets = [0, 15], sizes = [4, 241], strides = [1, 1]} : vector<4x256xf32> to vector<4x241xf32>
    %33 = vector.extract_strided_slice %0 {offsets = [0, 0], sizes = [4, 15], strides = [1, 1]} : vector<4x256xf32> to vector<4x15xf32>
    %34 = tpu.concatenate %32, %33 in 1 : vector<4x241xf32>, vector<4x15xf32> -> vector<4x256xf32>
    %35 = vector.extract_strided_slice %1 {offsets = [6, 0], sizes = [1, 256], strides = [1, 1]} : vector<9x256xf32> to vector<1x256xf32>
    %36 = vector.broadcast %35 : vector<1x256xf32> to vector<4x256xf32>
    %37 = arith.mulf %34, %36 : vector<4x256xf32>
    %38 = vector.extract_strided_slice %0 {offsets = [0, 16], sizes = [4, 240], strides = [1, 1]} : vector<4x256xf32> to vector<4x240xf32>
    %39 = vector.extract_strided_slice %0 {offsets = [0, 0], sizes = [4, 16], strides = [1, 1]} : vector<4x256xf32> to vector<4x16xf32>
    %40 = tpu.concatenate %38, %39 in 1 : vector<4x240xf32>, vector<4x16xf32> -> vector<4x256xf32>
    %41 = vector.extract_strided_slice %1 {offsets = [7, 0], sizes = [1, 256], strides = [1, 1]} : vector<9x256xf32> to vector<1x256xf32>
    %42 = vector.broadcast %41 : vector<1x256xf32> to vector<4x256xf32>
    %43 = arith.mulf %40, %42 : vector<4x256xf32>
    %44 = vector.extract_strided_slice %0 {offsets = [0, 17], sizes = [4, 239], strides = [1, 1]} : vector<4x256xf32> to vector<4x239xf32>
    %45 = vector.extract_strided_slice %0 {offsets = [0, 0], sizes = [4, 17], strides = [1, 1]} : vector<4x256xf32> to vector<4x17xf32>
    %46 = tpu.concatenate %44, %45 in 1 : vector<4x239xf32>, vector<4x17xf32> -> vector<4x256xf32>
    %47 = vector.extract_strided_slice %1 {offsets = [8, 0], sizes = [1, 256], strides = [1, 1]} : vector<9x256xf32> to vector<1x256xf32>
    %48 = vector.broadcast %47 : vector<1x256xf32> to vector<4x256xf32>
    %49 = arith.mulf %46, %48 : vector<4x256xf32>
    %50 = tpu.concatenate %7, %13, %19, %25, %0, %31, %37, %43, %49 in 0 : vector<4x256xf32>, vector<4x256xf32>, vector<4x256xf32>, vector<4x256xf32>, vector<4x256xf32>, vector<4x256xf32>, vector<4x256xf32>, vector<4x256xf32>, vector<4x256xf32> -> vector<36x256xf32>
    %c0_3 = arith.constant 0 : index
    %c0_4 = arith.constant 0 : index
    %51 = vector.load %arg3[%c0_3, %c0_4] : memref<8x36xf32, #tpu.memory_space<vmem>>, vector<8x36xf32>
    %cst = arith.constant dense<0.000000e+00> : vector<8x256xf32>
    %52 = tpu.matmul %51, %50, %cst {dimension_numbers = #tpu.dot_dimension_numbers<[1], [0], [0], [1], [0, 0, 1, 1], [], []>} : vector<8x36xf32>, vector<36x256xf32>, vector<8x256xf32> -> vector<8x256xf32>
    %c0_5 = arith.constant 0 : index
    %c0_6 = arith.constant 0 : index
    %53 = vector.load %arg4[%c0_5, %c0_6] : memref<8x1xf32, #tpu.memory_space<vmem>>, vector<8x1xf32>
    %54 = vector.broadcast %53 : vector<8x1xf32> to vector<8x256xf32>
    %55 = arith.addf %52, %54 : vector<8x256xf32>
    %cst_7 = arith.constant 0.000000e+00 : f32
    %56 = vector.broadcast %cst_7 : f32 to vector<8x256xf32>
    %57 = arith.maximumf %55, %56 : vector<8x256xf32>
    %cst_8 = arith.constant dense<0.000000e+00> : vector<8xf32>
    %58 = vector.multi_reduction <add>, %57, %cst_8 [1] : vector<8x256xf32> to vector<8xf32>
    %59 = vector.shape_cast %58 : vector<8xf32> to vector<8x1xf32>
    %60 = tpu.transpose %59, [1, 0] : vector<8x1xf32> -> vector<1x8xf32>
    %cst_9 = arith.constant 3.906250e-03 : f32
    %61 = vector.broadcast %cst_9 : f32 to vector<1x8xf32>
    %62 = arith.mulf %60, %61 : vector<1x8xf32>
    %c0_10 = arith.constant 0 : index
    %c0_11 = arith.constant 0 : index
    %63 = vector.load %arg5[%c0_10, %c0_11] : memref<8x32xf32, #tpu.memory_space<vmem>>, vector<8x32xf32>
    %cst_12 = arith.constant dense<0.000000e+00> : vector<1x32xf32>
    %64 = tpu.matmul %62, %63, %cst_12 {dimension_numbers = #tpu.dot_dimension_numbers<[1], [0], [0], [1], [0, 0, 1, 1], [], []>} : vector<1x8xf32>, vector<8x32xf32>, vector<1x32xf32> -> vector<1x32xf32>
    %c0_13 = arith.constant 0 : index
    %c0_14 = arith.constant 0 : index
    %65 = vector.load %arg6[%c0_13, %c0_14] : memref<1x32xf32, #tpu.memory_space<vmem>>, vector<1x32xf32>
    %66 = arith.addf %64, %65 : vector<1x32xf32>
    %cst_15 = arith.constant 0.000000e+00 : f32
    %67 = vector.broadcast %cst_15 : f32 to vector<1x32xf32>
    %68 = arith.maximumf %66, %67 : vector<1x32xf32>
    %c0_16 = arith.constant 0 : index
    %c0_17 = arith.constant 0 : index
    %69 = vector.load %arg7[%c0_16, %c0_17] : memref<32x128xf32, #tpu.memory_space<vmem>>, vector<32x128xf32>
    %cst_18 = arith.constant dense<0.000000e+00> : vector<1x128xf32>
    %70 = tpu.matmul %68, %69, %cst_18 {dimension_numbers = #tpu.dot_dimension_numbers<[1], [0], [0], [1], [0, 0, 1, 1], [], []>} : vector<1x32xf32>, vector<32x128xf32>, vector<1x128xf32> -> vector<1x128xf32>
    %c0_19 = arith.constant 0 : index
    %c0_20 = arith.constant 0 : index
    %71 = vector.load %arg8[%c0_19, %c0_20] : memref<1x128xf32, #tpu.memory_space<vmem>>, vector<1x128xf32>
    %72 = arith.addf %70, %71 : vector<1x128xf32>
    %c0_21 = arith.constant 0 : index
    %c0_22 = arith.constant 0 : index
    %c0_23 = arith.constant 0 : index
    %73 = vector.load %arg9[%c0_21, %c0_22, %c0_23] : memref<1x1x128xf32, #tpu.memory_space<vmem>>, vector<1x1x128xf32>
    %74 = vector.shape_cast %73 : vector<1x1x128xf32> to vector<1x128xf32>
    %75 = vector.shape_cast %72 : vector<1x128xf32> to vector<1x1x128xf32>
    tpu.vector_store %arg9[%c0_21, %c0_22, %c0_23], %75 {strides = array<i32>} : memref<1x1x128xf32, #tpu.memory_space<vmem>>, vector<1x1x128xf32>,
    return
  }
  func.func @transform_0(%arg0: i32) -> (i32, i32) {
    %c0_i32 = arith.constant 0 : i32
    %c0_i32_0 = arith.constant 0 : i32
    %c0_i32_1 = arith.constant 0 : i32
    return %c0_i32, %c0_i32_0 : i32, i32
  }
  func.func @transform_1(%arg0: i32) -> (i32, i32) {
    %c0_i32 = arith.constant 0 : i32
    %c0_i32_0 = arith.constant 0 : i32
    return %c0_i32, %arg0 : i32, i32
  }
  func.func @transform_2(%arg0: i32) -> (i32, i32) {
    %c0_i32 = arith.constant 0 : i32
    %c0_i32_0 = arith.constant 0 : i32
    %c0_i32_1 = arith.constant 0 : i32
    return %c0_i32, %c0_i32_0 : i32, i32
  }
  func.func @transform_3(%arg0: i32) -> (i32, i32) {
    %c0_i32 = arith.constant 0 : i32
    %c0_i32_0 = arith.constant 0 : i32
    %c0_i32_1 = arith.constant 0 : i32
    return %c0_i32, %c0_i32_0 : i32, i32
  }
  func.func @transform_4(%arg0: i32) -> (i32, i32) {
    %c0_i32 = arith.constant 0 : i32
    %c0_i32_0 = arith.constant 0 : i32
    %c0_i32_1 = arith.constant 0 : i32
    return %c0_i32, %c0_i32_0 : i32, i32
  }
  func.func @transform_5(%arg0: i32) -> (i32, i32) {
    %c0_i32 = arith.constant 0 : i32
    %c0_i32_0 = arith.constant 0 : i32
    %c0_i32_1 = arith.constant 0 : i32
    return %c0_i32, %c0_i32_0 : i32, i32
  }
  func.func @transform_6(%arg0: i32) -> (i32, i32) {
    %c0_i32 = arith.constant 0 : i32
    %c0_i32_0 = arith.constant 0 : i32
    %c0_i32_1 = arith.constant 0 : i32
    return %c0_i32, %c0_i32_0 : i32, i32
  }
  func.func @transform_7(%arg0: i32) -> (i32, i32) {
    %c0_i32 = arith.constant 0 : i32
    %c0_i32_0 = arith.constant 0 : i32
    %c0_i32_1 = arith.constant 0 : i32
    return %c0_i32, %c0_i32_0 : i32, i32
  }
  func.func @transform_8(%arg0: i32) -> (i32, i32, i32) {
    %c0_i32 = arith.constant 0 : i32
    %c0_i32_0 = arith.constant 0 : i32
    %c0_i32_1 = arith.constant 0 : i32
    return %arg0, %c0_i32, %c0_i32_0 : i32, i32, i32
  }
}

</mosaic_0001>

<llo_original>
// kernel: idm_forward.1
$region0: #{idm_forward.1}
  #allocation0 [shape = 'u32[]', space=smem, size = 0x4, offset = 0x4, fixed_abs, tag = 'smem constant byte address 0x4 - core index']
  #allocation1 [shape = 'u32[144,128]{1,0:T(1,128)}', space=vmem, size = 0x12000, scoped, tag = 'internal scratch']
  %s0 = inlined_call_operand.vmem [shape: f32[9,256], index: 0, kind: input, shape index: {}]
  %s1 = inlined_call_operand.vmem [shape: f32[4,512], index: 1, kind: input, shape index: {}]
  %s2 = inlined_call_operand.vmem [shape: f32[8,36], index: 2, kind: input, shape index: {}]
  %s3 = inlined_call_operand.vmem [shape: f32[8,1], index: 3, kind: input, shape index: {}]
  %s4 = inlined_call_operand.vmem [shape: f32[8,32], index: 4, kind: input, shape index: {}]
  %s5 = inlined_call_operand.vmem [shape: f32[1,32], index: 5, kind: input, shape index: {}]
  %s6 = inlined_call_operand.vmem [shape: f32[32,128], index: 6, kind: input, shape index: {}]
  %s7 = inlined_call_operand.vmem [shape: f32[1,128], index: 7, kind: input, shape index: {}]
  %s8 = inlined_call_operand.hbm [shape: f32[2,1,128], index: 8, kind: output, shape index: {}]
  %s9 = sld [smem:[#allocation0]]
  $region65: #{idm_forward.1} parent=0
    _
  %s11 = ssub.s32 1, %s9
  %s12 = scalar_select 0, %s11, %s9
  $region1: #{idm_forward.1} parent=0
    #allocation2 [shape = 'u8[1024]{0}', space=vmem, size = 0x400, scoped, tag = 'output window, operand 0']
    #allocation3 [shape = 's32[2]{0}', space=sflag, size = 0x8, scoped, tag = 'scoped memory for idm_forward.1']
    %13 = vsyncpa [#allocation3], 0
    %s14 = scalar_lea.sflag [#allocation3], 1
    %15 = vsyncpa %s14, 0
    loop: start=0, step=1, limit=4
    $region2: #{idm_forward.1} parent=1 // loop_pre_header
      _
    $region3: #{idm_forward.1} parent=1 // loop_header
      %s17 = sphi 0, %s21
      %p18 = scmp.ge.s32.totalorder %s17, 4
      %s25 = sphi 0, %s25
      %s27 = sphi 0, %s25
      %s28 = sphi 0, %s27
      %s42 = sphi 0, %s28
      %s48 = sphi 0, %s50
      %s51 = sphi 0, %s48
      %s52 = sphi 0, %s51
      %s68 = sphi 0, %s52
      %s72 = sphi 0, %s72
      %s74 = sphi 0, %s72
      %s75 = sphi 0, %s74
      %s89 = sphi 0, %s75
      %s93 = sphi 0, %s93
      %s95 = sphi 0, %s93
      %s96 = sphi 0, %s95
      %s110 = sphi 0, %s96
      %s114 = sphi 0, %s114
      %s116 = sphi 0, %s114
      %s117 = sphi 0, %s116
      %s131 = sphi 0, %s117
      %s135 = sphi 0, %s135
      %s137 = sphi 0, %s135
      %s138 = sphi 0, %s137
      %s152 = sphi 0, %s138
      %s156 = sphi 0, %s156
      %s158 = sphi 0, %s156
      %s159 = sphi 0, %s158
      %s173 = sphi 0, %s159
      %s177 = sphi 0, %s177
      %s179 = sphi 0, %s177
      %s180 = sphi 0, %s179
      %s194 = sphi 0, %s180
      %s200 = sphi 0, %s202
      %s203 = sphi 0, %s200
      %s204 = sphi 0, %s203
      %s220 = sphi 0, %s204
    $region4: #{idm_forward.1} parent=1 // loop_header_branch
      %20 = sbr.rel (%p18) target = $region8
    $region5: #{idm_forward.1} parent=1 // loop_body
      %s22 = ssub.s32 %s17, 1
      %s23 = ssub.s32 %s17, 2
      %s24 = sadd.s32 %s17, 1
      %s26 = sadd.s32 %s25, 1
      %p29 = scmp.eq.s32.totalorder %s17, 1
      %p30 = scmp.ne.s32.totalorder %s25, %s27
      %p31 = scmp.eq.s32.totalorder %s17, 0
      %p32 = por %p30, %p31
      %p33 = scmp.ne.s32.totalorder %s25, %s27
      %p34 = scmp.eq.s32.totalorder %s22, 1
      %p35 = por %p33, %p34
      %p36 = scmp.ne.s32.totalorder %s27, %s28
      %p37 = scmp.eq.s32.totalorder %s22, 0
      %p38 = por %p36, %p37
      %p39 = scmp.ne.s32.totalorder %s27, %s28
      %p40 = scmp.eq.s32.totalorder %s23, 1
      %p41 = por %p39, %p40
      %p43 = scmp.ne.s32.totalorder %s28, %s42
      %p44 = scmp.eq.s32.totalorder %s23, 0
      %p45 = por %p43, %p44
      %s46 = ssub.s32 %s17, %s24
      %p47 = scmp.eq.s32.totalorder %s46, 0
      %s49 = sadd.s32 %s48, 1
      %s50 = scalar_select %p47, %s48, %s49
      %p53 = pneg %p47
      %p54 = scmp.eq.s32.totalorder %s17, 1
      %p55 = por %p53, %p54
      %p56 = scmp.ne.s32.totalorder %s48, %s51
      %p57 = scmp.eq.s32.totalorder %s17, 0
      %p58 = por %p56, %p57
      %p59 = scmp.ne.s32.totalorder %s48, %s51
      %p60 = scmp.eq.s32.totalorder %s22, 1
      %p61 = por %p59, %p60
      %p62 = scmp.ne.s32.totalorder %s51, %s52
      %p63 = scmp.eq.s32.totalorder %s22, 0
      %p64 = por %p62, %p63
      %p65 = scmp.ne.s32.totalorder %s51, %s52
      %p66 = scmp.eq.s32.totalorder %s23, 1
      %p67 = por %p65, %p66
      %p69 = scmp.ne.s32.totalorder %s52, %s68
      %p70 = scmp.eq.s32.totalorder %s23, 0
      %p71 = por %p69, %p70
      %s73 = sadd.s32 %s72, 1
      %p76 = scmp.eq.s32.totalorder %s17, 1
      %p77 = scmp.ne.s32.totalorder %s72, %s74
      %p78 = scmp.eq.s32.totalorder %s17, 0
      %p79 = por %p77, %p78
      %p80 = scmp.ne.s32.totalorder %s72, %s74
      %p81 = scmp.eq.s32.totalorder %s22, 1
      %p82 = por %p80, %p81
      %p83 = scmp.ne.s32.totalorder %s74, %s75
      %p84 = scmp.eq.s32.totalorder %s22, 0
      %p85 = por %p83, %p84
      %p86 = scmp.ne.s32.totalorder %s74, %s75
      %p87 = scmp.eq.s32.totalorder %s23, 1
      %p88 = por %p86, %p87
      %p90 = scmp.ne.s32.totalorder %s75, %s89
      %p91 = scmp.eq.s32.totalorder %s23, 0
      %p92 = por %p90, %p91
      %s94 = sadd.s32 %s93, 1
      %p97 = scmp.eq.s32.totalorder %s17, 1
      %p98 = scmp.ne.s32.totalorder %s93, %s95
      %p99 = scmp.eq.s32.totalorder %s17, 0
      %p100 = por %p98, %p99
      %p101 = scmp.ne.s32.totalorder %s93, %s95
      %p102 = scmp.eq.s32.totalorder %s22, 1
      %p103 = por %p101, %p102
      %p104 = scmp.ne.s32.totalorder %s95, %s96
      %p105 = scmp.eq.s32.totalorder %s22, 0
      %p106 = por %p104, %p105
      %p107 = scmp.ne.s32.totalorder %s95, %s96
      %p108 = scmp.eq.s32.totalorder %s23, 1
      %p109 = por %p107, %p108
      %p111 = scmp.ne.s32.totalorder %s96, %s110
      %p112 = scmp.eq.s32.totalorder %s23, 0
      %p113 = por %p111, %p112
      %s115 = sadd.s32 %s114, 1
      %p118 = scmp.eq.s32.totalorder %s17, 1
      %p119 = scmp.ne.s32.totalorder %s114, %s116
      %p120 = scmp.eq.s32.totalorder %s17, 0
      %p121 = por %p119, %p120
      %p122 = scmp.ne.s32.totalorder %s114, %s116
      %p123 = scmp.eq.s32.totalorder %s22, 1
      %p124 = por %p122, %p123
      %p125 = scmp.ne.s32.totalorder %s116, %s117
      %p126 = scmp.eq.s32.totalorder %s22, 0
      %p127 = por %p125, %p126
      %p128 = scmp.ne.s32.totalorder %s116, %s117
      %p129 = scmp.eq.s32.totalorder %s23, 1
      %p130 = por %p128, %p129
      %p132 = scmp.ne.s32.totalorder %s117, %s131
      %p133 = scmp.eq.s32.totalorder %s23, 0
      %p134 = por %p132, %p133
      %s136 = sadd.s32 %s135, 1
      %p139 = scmp.eq.s32.totalorder %s17, 1
      %p140 = scmp.ne.s32.totalorder %s135, %s137
      %p141 = scmp.eq.s32.totalorder %s17, 0
      %p142 = por %p140, %p141
      %p143 = scmp.ne.s32.totalorder %s135, %s137
      %p144 = scmp.eq.s32.totalorder %s22, 1
      %p145 = por %p143, %p144
      %p146 = scmp.ne.s32.totalorder %s137, %s138
      %p147 = scmp.eq.s32.totalorder %s22, 0
      %p148 = por %p146, %p147
      %p149 = scmp.ne.s32.totalorder %s137, %s138
      %p150 = scmp.eq.s32.totalorder %s23, 1
      %p151 = por %p149, %p150
      %p153 = scmp.ne.s32.totalorder %s138, %s152
      %p154 = scmp.eq.s32.totalorder %s23, 0
      %p155 = por %p153, %p154
      %s157 = sadd.s32 %s156, 1
      %p160 = scmp.eq.s32.totalorder %s17, 1
      %p161 = scmp.ne.s32.totalorder %s156, %s158
      %p162 = scmp.eq.s32.totalorder %s17, 0
      %p163 = por %p161, %p162
      %p164 = scmp.ne.s32.totalorder %s156, %s158
      %p165 = scmp.eq.s32.totalorder %s22, 1
      %p166 = por %p164, %p165
      %p167 = scmp.ne.s32.totalorder %s158, %s159
      %p168 = scmp.eq.s32.totalorder %s22, 0
      %p169 = por %p167, %p168
      %p170 = scmp.ne.s32.totalorder %s158, %s159
      %p171 = scmp.eq.s32.totalorder %s23, 1
      %p172 = por %p170, %p171
      %p174 = scmp.ne.s32.totalorder %s159, %s173
      %p175 = scmp.eq.s32.totalorder %s23, 0
      %p176 = por %p174, %p175
      %s178 = sadd.s32 %s177, 1
      %p181 = scmp.eq.s32.totalorder %s17, 1
      %p182 = scmp.ne.s32.totalorder %s177, %s179
      %p183 = scmp.eq.s32.totalorder %s17, 0
      %p184 = por %p182, %p183
      %p185 = scmp.ne.s32.totalorder %s177, %s179
      %p186 = scmp.eq.s32.totalorder %s22, 1
      %p187 = por %p185, %p186
      %p188 = scmp.ne.s32.totalorder %s179, %s180
      %p189 = scmp.eq.s32.totalorder %s22, 0
      %p190 = por %p188, %p189
      %p191 = scmp.ne.s32.totalorder %s179, %s180
      %p192 = scmp.eq.s32.totalorder %s23, 1
      %p193 = por %p191, %p192
      %p195 = scmp.ne.s32.totalorder %s180, %s194
      %p196 = scmp.eq.s32.totalorder %s23, 0
      %p197 = por %p195, %p196
      %s198 = ssub.s32 %s17, %s24
      %p199 = scmp.eq.s32.totalorder %s198, 0
      %s201 = sadd.s32 %s200, 1
      %s202 = scalar_select %p199, %s200, %s201
      %p205 = pneg %p199
      %p206 = scmp.eq.s32.totalorder %s17, 1
      %p207 = por %p205, %p206
      %p208 = scmp.ne.s32.totalorder %s200, %s203
      %p209 = scmp.eq.s32.totalorder %s17, 0
      %p210 = por %p208, %p209
      %p211 = scmp.ne.s32.totalorder %s200, %s203
      %p212 = scmp.eq.s32.totalorder %s22, 1
      %p213 = por %p211, %p212
      %p214 = scmp.ne.s32.totalorder %s203, %s204
      %p215 = scmp.eq.s32.totalorder %s22, 0
      %p216 = por %p214, %p215
      %p217 = scmp.ne.s32.totalorder %s203, %s204
      %p218 = scmp.eq.s32.totalorder %s23, 1
      %p219 = por %p217, %p218
      %p221 = scmp.ne.s32.totalorder %s204, %s220
      %p222 = scmp.eq.s32.totalorder %s23, 0
      %p223 = por %p221, %p222
      %p224 = scmp.le.s32.totalorder 1, %s17
      %p225 = scmp.lt.s32.totalorder %s17, 3
      %p226 = pnand %p224, %p225
      %p227 = pneg %p226
      // Predicated region
      $region9: #{idm_forward.1} parent=5 // pred_check
        _
      $region10: #{idm_forward.1} parent=5 // pred_check_branch
        %229 = sbr.rel (%p226) target = $region12
      $region11: #{idm_forward.1} parent=5 // pred_region
        %s230 = ssub.s32 %s17, 1
        // Predicated region
        $region13: #{idm_forward.1} parent=11 // pred_check
          %p231 = pneg %p38
        $region14: #{idm_forward.1} parent=11 // pred_check_branch
          %233 = sbr.rel (%p231) target = $region16
        $region15: #{idm_forward.1} parent=11 // pred_region
          _
        $region16: #{idm_forward.1} parent=11 // pred_fallthru
          _
        // Predicated region
        $region17: #{idm_forward.1} parent=11 // pred_check
          %p234 = pneg %p85
        $region18: #{idm_forward.1} parent=11 // pred_check_branch
          %236 = sbr.rel (%p234) target = $region20
        $region19: #{idm_forward.1} parent=11 // pred_region
          _
        $region20: #{idm_forward.1} parent=11 // pred_fallthru
          _
        // Predicated region
        $region21: #{idm_forward.1} parent=11 // pred_check
          %p237 = pneg %p106
        $region22: #{idm_forward.1} parent=11 // pred_check_branch
          %239 = sbr.rel (%p237) target = $region24
        $region23: #{idm_forward.1} parent=11 // pred_region
          _
        $region24: #{idm_forward.1} parent=11 // pred_fallthru
          _
        // Predicated region
        $region25: #{idm_forward.1} parent=11 // pred_check
          %p240 = pneg %p127
        $region26: #{idm_forward.1} parent=11 // pred_check_branch
          %242 = sbr.rel (%p240) target = $region28
        $region27: #{idm_forward.1} parent=11 // pred_region
          _
        $region28: #{idm_forward.1} parent=11 // pred_fallthru
          _
        // Predicated region
        $region29: #{idm_forward.1} parent=11 // pred_check
          %p243 = pneg %p148
        $region30: #{idm_forward.1} parent=11 // pred_check_branch
          %245 = sbr.rel (%p243) target = $region32
        $region31: #{idm_forward.1} parent=11 // pred_region
          _
        $region32: #{idm_forward.1} parent=11 // pred_fallthru
          _
        // Predicated region
        $region33: #{idm_forward.1} parent=11 // pred_check
          %p246 = pneg %p169
        $region34: #{idm_forward.1} parent=11 // pred_check_branch
          %248 = sbr.rel (%p246) target = $region36
        $region35: #{idm_forward.1} parent=11 // pred_region
          _
        $region36: #{idm_forward.1} parent=11 // pred_fallthru
          _
        // Predicated region
        $region37: #{idm_forward.1} parent=11 // pred_check
          %p249 = pneg %p190
        $region38: #{idm_forward.1} parent=11 // pred_check_branch
          %251 = sbr.rel (%p249) target = $region40
        $region39: #{idm_forward.1} parent=11 // pred_region
          _
        $region40: #{idm_forward.1} parent=11 // pred_fallthru
          _
      $region12: #{idm_forward.1} parent=5 // pred_fallthru
        _
      %p252 = scmp.lt.s32.totalorder %s17, 2
      // Predicated region
      $region41: #{idm_forward.1} parent=5 // pred_check
        %p253 = pneg %p252
      $region42: #{idm_forward.1} parent=5 // pred_check_branch
        %255 = sbr.rel (%p253) target = $region44
      $region43: #{idm_forward.1} parent=5 // pred_region
        // Predicated region
        $region45: #{idm_forward.1} parent=43 // pred_check
          %p256 = pneg %p58
        $region46: #{idm_forward.1} parent=43 // pred_check_branch
          %258 = sbr.rel (%p256) target = $region48
        $region47: #{idm_forward.1} parent=43 // pred_region
          %s259 = smul.u32 2, %s17
          %p260 = scmp.lt.s32.totalorder %s259, 3
          %s261 = scalar_select %p260, %s259, 3
          %s262 = smul.addr %s261, 4
          %s263 = scalar_lea.vmem %s1, %s262
          %s264 = smul.u32 2, %s17
        $region48: #{idm_forward.1} parent=43 // pred_fallthru
          _
      $region44: #{idm_forward.1} parent=5 // pred_fallthru
        _
      %p265 = scmp.le.s32.totalorder 1, %s17
      %p266 = scmp.lt.s32.totalorder %s17, 3
      %p267 = pnand %p265, %p266
      %p268 = pneg %p267
      // Predicated region
      $region49: #{idm_forward.1} parent=5 // pred_check
        _
      $region50: #{idm_forward.1} parent=5 // pred_check_branch
        %270 = sbr.rel (%p267) target = $region52
      $region51: #{idm_forward.1} parent=5 // pred_region
        %s271 = ssub.s32 %s17, 1
        %p272 = pneg %p38
        %p273 = pneg %p35
        %s274 = smul.u32 2, %s22
        %p275 = scmp.lt.s32.totalorder %s274, 3
        %s276 = scalar_select %p275, %s274, 3
        %s277 = smul.addr %s276, 4
        %s278 = scalar_lea.vmem %s1, %s277
        %p279 = pneg %p64
        %p280 = pneg %p61
        %p281 = pneg %p85
        %p282 = pneg %p82
        %p283 = pneg %p106
        %p284 = pneg %p103
        %p285 = pneg %p127
        %p286 = pneg %p124
        %p287 = pneg %p148
        %p288 = pneg %p145
        %p289 = pneg %p169
        %p290 = pneg %p166
        %p291 = pneg %p190
        %p292 = pneg %p187
        %p293 = pneg %p216
        %p294 = pneg %p213
        %s295 = sand.u32 %s203, 1
        %s296 = scalar_lea.sflag [#allocation3], %s295
        %s297 = sand.u32 %s203, 1
        %s298 = scalar_lea.vmem [#allocation2], %s297
        %s299 = smul.u32 2, %s22
        %p300 = scmp.lt.s32.totalorder %s299, 3
        %s301 = scalar_select %p300, %s299, 3
        %s302 = smul.addr %s301, 4
        %s303 = scalar_lea.vmem %s1, %s302
        %s304 = smul.u32 2, %s22
        %v305 = vld [vmem:[%s303] sm:$0xff]
        %v306 = vld [vmem:[%s0] sm:$0xff]
        %v307 = vld [vmem:[%s0 + $0x8] sm:$0xff]
        %v308 = vld [vmem:[%s0 + $0x10] sm:$0x1]
        %v309 = vld [vmem:[%s0 + $0x18] sm:$0x1]
        %v311 = vcombine.high %v305, %v305
        %312 = vrot.lane.b32.xlu0 %v311, 17
        %v313 = vpop.permute.xlu0 %312
        %315 = vrot.lane.b32.xlu0 %v305, 17
        %v316 = vpop.permute.xlu0 %315
        %vm317 = vcmask 138240
        %v318 = vsel %vm317, %v316, %v313
        %v321 = vsel %vm317, %v313, %v316
        %v322 = vlaneseq
        %v323 = vshrl.u32 %v322, 7
        %v324 = vsub.s32 0, %v323
        %v325 = vrot.slane %v306, %v324
        %v326 = vlaneseq
        %v327 = vshrl.u32 %v326, 7
        %v328 = vsub.s32 0, %v327
        %v329 = vrot.slane %v307, %v328
        %v330 = vmul.f32 %v321, %v325
        %v331 = vmul.f32 %v318, %v329
        %332 = vrot.lane.b32.xlu0 %v311, 16
        %v333 = vpop.permute.xlu0 %332
        %335 = vrot.lane.b32.xlu0 %v305, 16
        %v336 = vpop.permute.xlu0 %335
        %vm337 = vcmask 130048
        %v338 = vsel %vm337, %v336, %v333
        %v341 = vsel %vm337, %v333, %v336
        %v342 = vlaneseq
        %v343 = vshrl.u32 %v342, 7
        %v344 = vsub.s32 1, %v343
        %v345 = vrot.slane %v306, %v344
        %v346 = vlaneseq
        %v347 = vshrl.u32 %v346, 7
        %v348 = vsub.s32 1, %v347
        %v349 = vrot.slane %v307, %v348
        %v350 = vmul.f32 %v341, %v345
        %v351 = vmul.f32 %v338, %v349
        %352 = vrot.lane.b32.xlu0 %v311, 15
        %v353 = vpop.permute.xlu0 %352
        %355 = vrot.lane.b32.xlu0 %v305, 15
        %v356 = vpop.permute.xlu0 %355
        %vm357 = vcmask 121856
        %v358 = vsel %vm357, %v356, %v353
        %v361 = vsel %vm357, %v353, %v356
        %v362 = vlaneseq
        %v363 = vshrl.u32 %v362, 7
        %v364 = vsub.s32 2, %v363
        %v365 = vrot.slane %v306, %v364
        %v366 = vlaneseq
        %v367 = vshrl.u32 %v366, 7
        %v368 = vsub.s32 2, %v367
        %v369 = vrot.slane %v307, %v368
        %v370 = vmul.f32 %v361, %v365
        %v371 = vmul.f32 %v358, %v369
        %372 = vrot.lane.b32.xlu0 %v311, 1
        %v373 = vpop.permute.xlu0 %372
        %375 = vrot.lane.b32.xlu0 %v305, 1
        %v376 = vpop.permute.xlu0 %375
        %vm377 = vcmask 7168
        %v378 = vsel %vm377, %v376, %v373
        %v381 = vsel %vm377, %v373, %v376
        %v382 = vlaneseq
        %v383 = vshrl.u32 %v382, 7
        %v384 = vsub.s32 3, %v383
        %v385 = vrot.slane %v306, %v384
        %v386 = vlaneseq
        %v387 = vshrl.u32 %v386, 7
        %v388 = vsub.s32 3, %v387
        %v389 = vrot.slane %v307, %v388
        %v390 = vmul.f32 %v381, %v385
        %v391 = vmul.f32 %v378, %v389
        %392 = vrot.lane.b32.xlu0 %v305, 127
        %v393 = vpop.permute.xlu0 %392
        %394 = vrot.lane.b32.xlu0 %v311, 127
        %v395 = vpop.permute.xlu0 %394
        %vm396 = vcmask 1039360
        %v397 = vsel %vm396, %v393, %v395
        %v401 = vsel %vm396, %v395, %v393
        %v402 = vlaneseq
        %v403 = vshrl.u32 %v402, 7
        %v404 = vsub.s32 5, %v403
        %v405 = vrot.slane %v306, %v404
        %v406 = vlaneseq
        %v407 = vshrl.u32 %v406, 7
        %v408 = vsub.s32 5, %v407
        %v409 = vrot.slane %v307, %v408
        %v410 = vmul.f32 %v397, %v405
        %v411 = vmul.f32 %v401, %v409
        %412 = vrot.lane.b32.xlu0 %v305, 113
        %v413 = vpop.permute.xlu0 %412
        %414 = vrot.lane.b32.xlu0 %v311, 113
        %v415 = vpop.permute.xlu0 %414
        %vm416 = vcmask 924672
        %v417 = vsel %vm416, %v413, %v415
        %v421 = vsel %vm416, %v415, %v413
        %v422 = vlaneseq
        %v423 = vshrl.u32 %v422, 7
        %v424 = vsub.s32 6, %v423
        %v425 = vrot.slane %v306, %v424
        %v426 = vlaneseq
        %v427 = vshrl.u32 %v426, 7
        %v428 = vsub.s32 6, %v427
        %v429 = vrot.slane %v307, %v428
        %v430 = vmul.f32 %v417, %v425
        %v431 = vmul.f32 %v421, %v429
        %432 = vrot.lane.b32.xlu0 %v305, 112
        %v433 = vpop.permute.xlu0 %432
        %434 = vrot.lane.b32.xlu0 %v311, 112
        %v435 = vpop.permute.xlu0 %434
        %vm436 = vcmask 916480
        %v437 = vsel %vm436, %v433, %v435
        %v441 = vsel %vm436, %v435, %v433
        %v442 = vlaneseq
        %v443 = vshrl.u32 %v442, 7
        %v444 = vsub.s32 7, %v443
        %v445 = vrot.slane %v306, %v444
        %v446 = vlaneseq
        %v447 = vshrl.u32 %v446, 7
        %v448 = vsub.s32 7, %v447
        %v449 = vrot.slane %v307, %v448
        %v450 = vmul.f32 %v437, %v445
        %v451 = vmul.f32 %v441, %v449
        %452 = vrot.lane.b32.xlu0 %v305, 111
        %v453 = vpop.permute.xlu0 %452
        %454 = vrot.lane.b32.xlu0 %v311, 111
        %v455 = vpop.permute.xlu0 %454
        %vm456 = vcmask 908288
        %v457 = vsel %vm456, %v453, %v455
        %v461 = vsel %vm456, %v455, %v453
        %v462 = vlaneseq
        %v463 = vshrl.u32 %v462, 7
        %v464 = vsub.s32 0, %v463
        %v465 = vrot.slane %v308, %v464
        %v466 = vlaneseq
        %v467 = vshrl.u32 %v466, 7
        %v468 = vsub.s32 0, %v467
        %v469 = vrot.slane %v309, %v468
        %v470 = vmul.f32 %v457, %v465
        %v471 = vmul.f32 %v461, %v469
        %v474 = vrot.slane %v350, 4
        %v475 = vrot.slane %v351, 4
        %v480 = vrot.slane %v390, 4
        %v481 = vrot.slane %v391, 4
        %v487 = vrot.slane %v410, 4
        %v488 = vrot.slane %v411, 4
        %v493 = vrot.slane %v450, 4
        %v494 = vrot.slane %v451, 4
        %vm497 = vcmask 1043456
        %v498 = vsel %vm497, %v330, %v474
        %v499 = vsel %vm497, %v331, %v475
        %v500 = vsel %vm497, %v370, %v480
        %v501 = vsel %vm497, %v371, %v481
        %v502 = vsel %vm497, %v305, %v487
        %v503 = vsel %vm497, %v311, %v488
        %v504 = vsel %vm497, %v430, %v493
        %v505 = vsel %vm497, %v431, %v494
        %v506 = vld [vmem:[%s2] sm:$0xff]
        %v507 = vld [vmem:[%s3] sm:$0xff]
        %509 = vset.pattern.permute.xlu0 0
        %510 = vperm.xlu0 %509, %v507
        %v511 = vpop.permute.xlu0 %510
        %vm513 = vcmask 293888
        %v515 = vsel %vm513, %v506, 0
        %v518 = vsel %vm497, %v470, 0
        %v521 = vsel %vm497, %v471, 0
        %523 = vmatprep.subr.mxu0 0.0
        %524 = vmatpush1.msra.mxu0 0.0
        %525 = vmatprep.subr.mxu0 0.0
        %526 = vmatpush1.msra.mxu0 0.0
        %527 = vmatprep.subr.mxu0 0.0
        %528 = vmatpush1.msra.mxu0 0.0
        %529 = vmatprep.subr.mxu0 0.0
        %530 = vmatpush1.msra.mxu0 0.0
        %531 = vmatprep.subr.mxu0 0.0
        %532 = vmatpush1.msra.mxu0 0.0
        %533 = vmatprep.subr.mxu0 0.0
        %534 = vmatpush1.msra.mxu0 0.0
        %535 = vmatprep.subr.mxu0 0.0
        %536 = vmatpush1.msra.mxu0 0.0
        %537 = vmatprep.subr.mxu0 0.0
        %538 = vmatpush1.msra.mxu0 0.0
        %539 = vmatprep.subr.mxu0 0.0
        %540 = vmatpush1.msra.mxu0 0.0
        %541 = vmatprep.subr.mxu0 0.0
        %542 = vmatpush1.msra.mxu0 0.0
        %543 = vmatprep.subr.mxu0 0.0
        %544 = vmatpush1.msra.mxu0 0.0
        %545 = vmatprep.subr.mxu0 %v521
        %546 = vmatpush1.msra.mxu0 %v518
        %547 = vmatprep.subr.mxu0 %v505
        %548 = vmatpush1.msra.mxu0 %v504
        %549 = vmatprep.subr.mxu0 %v503
        %550 = vmatpush1.msra.mxu0 %v502
        %551 = vmatprep.subr.mxu0 %v501
        %552 = vmatpush1.msra.mxu0 %v500
        %553 = vmatprep.subr.mxu0 %v499
        %554 = vmatpush1.msra.mxu0 %v498
        %555 = vmatprep.subr.mxu0 0.0
        %556 = vmatpush2.msra.mxu0 0.0
        %557 = vmatprep.subr.mxu0 0.0
        %558 = vmatpush2.msra.mxu0 0.0
        %559 = vmatprep.subr.mxu0 0.0
        %560 = vmatpush2.msra.mxu0 0.0
        %561 = vmatprep.subr.mxu0 0.0
        %562 = vmatpush2.msra.mxu0 0.0
        %563 = vmatprep.subr.mxu0 0.0
        %564 = vmatpush2.msra.mxu0 0.0
        %565 = vmatprep.subr.mxu0 0.0
        %566 = vmatpush2.msra.mxu0 0.0
        %567 = vmatprep.subr.mxu0 0.0
        %568 = vmatpush2.msra.mxu0 0.0
        %569 = vmatprep.subr.mxu0 0.0
        %570 = vmatpush2.msra.mxu0 0.0
        %571 = vmatprep.subr.mxu0 0.0
        %572 = vmatpush2.msra.mxu0 0.0
        %573 = vmatprep.subr.mxu0 0.0
        %574 = vmatpush2.msra.mxu0 0.0
        %575 = vmatprep.subr.mxu0 0.0
        %576 = vmatpush2.msra.mxu0 0.0
        %577 = vmatprep.subr.mxu0 0.0
        %578 = vmatpush2.msra.mxu0 0.0
        %579 = vmatprep.subr.mxu0 0.0
        %580 = vmatpush2.msra.mxu0 0.0
        %581 = vmatprep.subr.mxu0 0.0
        %582 = vmatpush2.msra.mxu0 0.0
        %583 = vmatprep.subr.mxu0 0.0
        %584 = vmatpush2.msra.mxu0 0.0
        %585 = vmatprep.subr.mxu0 0.0
        %586 = vmatpush2.msra.mxu0 0.0
        %587 = vmatprep.mubr.f32.mxu0 0.0
        %588 = vmatmul.mubr.f32.gmra.mxu0 %v515
        %v589 = vpop.f32.mrf.mxu0
        %v590 = vadd.f32 %v511, %v589
        %v591 = vpop.f32.mrf.mxu0
        %v592 = vadd.f32 %v511, %v591
        %593 = vdwg.mxu0
        %v594 = vmax.f32 %v590, 0.0
        %v595 = vmax.f32 %v592, 0.0
        %v596 = vadd.f32 %v594, %v595
        %597 = vadd.xlane.f32.xlu0 %v596
        %v598 = vpop.xlane.xlu0 %597
        %599 = vxpose.xlu0.b32.start [1/16] %v598, 128
        %600 = vxpose.xlu0.b32.cont [2/16] 0.0, 128
        %601 = vxpose.xlu0.b32.cont [3/16] 0.0, 128
        %602 = vxpose.xlu0.b32.cont [4/16] 0.0, 128
        %603 = vxpose.xlu0.b32.cont [5/16] 0.0, 128
        %604 = vxpose.xlu0.b32.cont [6/16] 0.0, 128
        %605 = vxpose.xlu0.b32.cont [7/16] 0.0, 128
        %606 = vxpose.xlu0.b32.cont [8/16] 0.0, 128
        %607 = vxpose.xlu0.b32.cont [9/16] 0.0, 128
        %608 = vxpose.xlu0.b32.cont [10/16] 0.0, 128
        %609 = vxpose.xlu0.b32.cont [11/16] 0.0, 128
        %610 = vxpose.xlu0.b32.cont [12/16] 0.0, 128
        %611 = vxpose.xlu0.b32.cont [13/16] 0.0, 128
        %612 = vxpose.xlu0.b32.cont [14/16] 0.0, 128
        %613 = vxpose.xlu0.b32.cont [15/16] 0.0, 128
        %614 = vxpose.xlu0.b32.end [16/16] 0.0, 128
        %v615 = vpop.trf.xlu0
        %v616 = vpop.trf.xlu0
        %v617 = vpop.trf.xlu0
        %v618 = vpop.trf.xlu0
        %v619 = vpop.trf.xlu0
        %v620 = vpop.trf.xlu0
        %v621 = vpop.trf.xlu0
        %v622 = vpop.trf.xlu0
        %v623 = vpop.trf.xlu0
        %v624 = vpop.trf.xlu0
        %v625 = vpop.trf.xlu0
        %v626 = vpop.trf.xlu0
        %v627 = vpop.trf.xlu0
        %v628 = vpop.trf.xlu0
        %v629 = vpop.trf.xlu0
        %v630 = vpop.trf.xlu0
        %v631 = vmul.f32 %v615, 0.00390625
        %v632 = vld [vmem:[%s4] sm:$0xff]
        %v633 = vld [vmem:[%s5] sm:$0x1]
        %vm634 = vcmask 64512
        %v636 = vsel %vm634, %v631, 0
        %638 = vmatprep.subr.mxu0 0.0
        %639 = vmatpush1.msra.mxu0 0.0
        %640 = vmatprep.subr.mxu0 0.0
        %641 = vmatpush1.msra.mxu0 0.0
        %642 = vmatprep.subr.mxu0 0.0
        %643 = vmatpush1.msra.mxu0 0.0
        %644 = vmatprep.subr.mxu0 0.0
        %645 = vmatpush1.msra.mxu0 0.0
        %646 = vmatprep.subr.mxu0 0.0
        %647 = vmatpush1.msra.mxu0 0.0
        %648 = vmatprep.subr.mxu0 0.0
        %649 = vmatpush1.msra.mxu0 0.0
        %650 = vmatprep.subr.mxu0 0.0
        %651 = vmatpush1.msra.mxu0 0.0
        %652 = vmatprep.subr.mxu0 0.0
        %653 = vmatpush1.msra.mxu0 0.0
        %654 = vmatprep.subr.mxu0 0.0
        %655 = vmatpush1.msra.mxu0 0.0
        %656 = vmatprep.subr.mxu0 0.0
        %657 = vmatpush1.msra.mxu0 0.0
        %658 = vmatprep.subr.mxu0 0.0
        %659 = vmatpush1.msra.mxu0 0.0
        %660 = vmatprep.subr.mxu0 0.0
        %661 = vmatpush1.msra.mxu0 0.0
        %662 = vmatprep.subr.mxu0 0.0
        %663 = vmatpush1.msra.mxu0 0.0
        %664 = vmatprep.subr.mxu0 0.0
        %665 = vmatpush1.msra.mxu0 0.0
        %666 = vmatprep.subr.mxu0 0.0
        %667 = vmatpush1.msra.mxu0 0.0
        %668 = vmatprep.subr.mxu0 0.0
        %669 = vmatpush1.msra.mxu0 %v632
        %670 = vmatprep.subr.mxu0 0.0
        %671 = vmatpush2.msra.mxu0 0.0
        %672 = vmatprep.subr.mxu0 0.0
        %673 = vmatpush2.msra.mxu0 0.0
        %674 = vmatprep.subr.mxu0 0.0
        %675 = vmatpush2.msra.mxu0 0.0
        %676 = vmatprep.subr.mxu0 0.0
        %677 = vmatpush2.msra.mxu0 0.0
        %678 = vmatprep.subr.mxu0 0.0
        %679 = vmatpush2.msra.mxu0 0.0
        %680 = vmatprep.subr.mxu0 0.0
        %681 = vmatpush2.msra.mxu0 0.0
        %682 = vmatprep.subr.mxu0 0.0
        %683 = vmatpush2.msra.mxu0 0.0
        %684 = vmatprep.subr.mxu0 0.0
        %685 = vmatpush2.msra.mxu0 0.0
        %686 = vmatprep.subr.mxu0 0.0
        %687 = vmatpush2.msra.mxu0 0.0
        %688 = vmatprep.subr.mxu0 0.0
        %689 = vmatpush2.msra.mxu0 0.0
        %690 = vmatprep.subr.mxu0 0.0
        %691 = vmatpush2.msra.mxu0 0.0
        %692 = vmatprep.subr.mxu0 0.0
        %693 = vmatpush2.msra.mxu0 0.0
        %694 = vmatprep.subr.mxu0 0.0
        %695 = vmatpush2.msra.mxu0 0.0
        %696 = vmatprep.subr.mxu0 0.0
        %697 = vmatpush2.msra.mxu0 0.0
        %698 = vmatprep.subr.mxu0 0.0
        %699 = vmatpush2.msra.mxu0 0.0
        %700 = vmatprep.subr.mxu0 0.0
        %701 = vmatpush2.msra.mxu0 0.0
        %702 = vmatprep.mubr.f32.mxu0 0.0
        %703 = vmatmul.mubr.f32.gmra.mxu0 %v636
        %v704 = vpop.f32.mrf.mxu0
        %v705 = vadd.f32 %v633, %v704
        %v706 = vpop.f32.mrf.mxu0
        %707 = vdwg.mxu0
        %v708 = vmax.f32 %v705, 0.0
        %v709 = vld [vmem:[%s6] sm:$0xff]
        %v710 = vld [vmem:[%s6 + $0x8] sm:$0xff]
        %v711 = vld [vmem:[%s6 + $0x10] sm:$0xff]
        %v712 = vld [vmem:[%s6 + $0x18] sm:$0xff]
        %v713 = vld [vmem:[%s7] sm:$0x1]
        %vm714 = vcmask 261120
        %v716 = vsel %vm714, %v708, 0
        %718 = vmatprep.subr.mxu0 0.0
        %719 = vmatpush1.msra.mxu0 0.0
        %720 = vmatprep.subr.mxu0 0.0
        %721 = vmatpush1.msra.mxu0 0.0
        %722 = vmatprep.subr.mxu0 0.0
        %723 = vmatpush1.msra.mxu0 0.0
        %724 = vmatprep.subr.mxu0 0.0
        %725 = vmatpush1.msra.mxu0 0.0
        %726 = vmatprep.subr.mxu0 0.0
        %727 = vmatpush1.msra.mxu0 0.0
        %728 = vmatprep.subr.mxu0 0.0
        %729 = vmatpush1.msra.mxu0 0.0
        %730 = vmatprep.subr.mxu0 0.0
        %731 = vmatpush1.msra.mxu0 0.0
        %732 = vmatprep.subr.mxu0 0.0
        %733 = vmatpush1.msra.mxu0 0.0
        %734 = vmatprep.subr.mxu0 0.0
        %735 = vmatpush1.msra.mxu0 0.0
        %736 = vmatprep.subr.mxu0 0.0
        %737 = vmatpush1.msra.mxu0 0.0
        %738 = vmatprep.subr.mxu0 0.0
        %739 = vmatpush1.msra.mxu0 0.0
        %740 = vmatprep.subr.mxu0 0.0
        %741 = vmatpush1.msra.mxu0 0.0
        %742 = vmatprep.subr.mxu0 0.0
        %743 = vmatpush1.msra.mxu0 %v712
        %744 = vmatprep.subr.mxu0 0.0
        %745 = vmatpush1.msra.mxu0 %v711
        %746 = vmatprep.subr.mxu0 0.0
        %747 = vmatpush1.msra.mxu0 %v710
        %748 = vmatprep.subr.mxu0 0.0
        %749 = vmatpush1.msra.mxu0 %v709
        %750 = vmatprep.subr.mxu0 0.0
        %751 = vmatpush2.msra.mxu0 0.0
        %752 = vmatprep.subr.mxu0 0.0
        %753 = vmatpush2.msra.mxu0 0.0
        %754 = vmatprep.subr.mxu0 0.0
        %755 = vmatpush2.msra.mxu0 0.0
        %756 = vmatprep.subr.mxu0 0.0
        %757 = vmatpush2.msra.mxu0 0.0
        %758 = vmatprep.subr.mxu0 0.0
        %759 = vmatpush2.msra.mxu0 0.0
        %760 = vmatprep.subr.mxu0 0.0
        %761 = vmatpush2.msra.mxu0 0.0
        %762 = vmatprep.subr.mxu0 0.0
        %763 = vmatpush2.msra.mxu0 0.0
        %764 = vmatprep.subr.mxu0 0.0
        %765 = vmatpush2.msra.mxu0 0.0
        %766 = vmatprep.subr.mxu0 0.0
        %767 = vmatpush2.msra.mxu0 0.0
        %768 = vmatprep.subr.mxu0 0.0
        %769 = vmatpush2.msra.mxu0 0.0
        %770 = vmatprep.subr.mxu0 0.0
        %771 = vmatpush2.msra.mxu0 0.0
        %772 = vmatprep.subr.mxu0 0.0
        %773 = vmatpush2.msra.mxu0 0.0
        %774 = vmatprep.subr.mxu0 0.0
        %775 = vmatpush2.msra.mxu0 0.0
        %776 = vmatprep.subr.mxu0 0.0
        %777 = vmatpush2.msra.mxu0 0.0
        %778 = vmatprep.subr.mxu0 0.0
        %779 = vmatpush2.msra.mxu0 0.0
        %780 = vmatprep.subr.mxu0 0.0
        %781 = vmatpush2.msra.mxu0 0.0
        %782 = vmatprep.mubr.f32.mxu0 0.0
        %783 = vmatmul.mubr.f32.gmra.mxu0 %v716
        %v784 = vpop.f32.mrf.mxu0
        %v785 = vadd.f32 %v713, %v784
        %v786 = vpop.f32.mrf.mxu0
        %787 = vdwg.mxu0
        %788 = vst [vmem:[%s298] sm:$0x1] %v785
        %s789 = sand.u32 %s203, 1
        %s790 = scalar_lea.sflag [#allocation3], %s789
        %s791 = sand.u32 %s203, 1
        %s792 = scalar_lea.vmem [#allocation2], %s791
        // Predicated region
        $region53: #{idm_forward.1} parent=51 // pred_check
          %p793 = pneg %p213
        $region54: #{idm_forward.1} parent=51 // pred_check_branch
          %795 = sbr.rel (%p793) target = $region56
        $region55: #{idm_forward.1} parent=51 // pred_region
          %s797 = ssub.s32 16, 16
          %798 = vsyncadd %s790, %s797
          %s799 = smul.addr %s22, 16
          %s800 = scalar_lea.hbm %s8, %s799
          %s802 = sshll.u32 %s792, 4
          %s803 = int_to_ptr.vmem [resolvable:$true] %s802
          %805 = dma.vmem_to_hbm [thread:$0]  %s803, 16, %s800, %s790
        $region56: #{idm_forward.1} parent=51 // pred_fallthru
          _
      $region52: #{idm_forward.1} parent=5 // pred_fallthru
        _
      %p806 = scmp.le.s32.totalorder 2, %s17
      // Predicated region
      $region57: #{idm_forward.1} parent=5 // pred_check
        %p807 = pneg %p806
      $region58: #{idm_forward.1} parent=5 // pred_check_branch
        %809 = sbr.rel (%p807) target = $region60
      $region59: #{idm_forward.1} parent=5 // pred_region
        %s810 = ssub.s32 %s17, 2
        // Predicated region
        $region61: #{idm_forward.1} parent=59 // pred_check
          %p811 = pneg %p219
        $region62: #{idm_forward.1} parent=59 // pred_check_branch
          %813 = sbr.rel (%p811) target = $region64
        $region63: #{idm_forward.1} parent=59 // pred_region
          %s814 = sand.u32 %s204, 1
          %s815 = scalar_lea.sflag [#allocation3], %s814
          %s816 = sand.u32 %s204, 1
          %s817 = scalar_lea.vmem [#allocation2], %s816
          %818 = dma.done %s815, 16
        $region64: #{idm_forward.1} parent=59 // pred_fallthru
          _
      $region60: #{idm_forward.1} parent=5 // pred_fallthru
        _
    $region6: #{idm_forward.1} parent=1 // loop_footer
      %s21 = sadd.s32 1, %s17
    $region7: #{idm_forward.1} parent=1 // loop_footer_branch
      %16 = sbr.rel target = $region3
    $region8: #{idm_forward.1} parent=1 // loop_exit
      _
    %819 = vsyncpa [#allocation3], 1
    %s820 = scalar_lea.sflag [#allocation3], 1
    %821 = vsyncpa %s820, 1

</llo_original>
